<compile_context>
chip_gen: v5e
topology: v5e:2x2
jax: 0.10.0
libtpu: 0.0.40
codegen_flags: <defaults>
</compile_context>

<pallas_src>
import functools

import jax
import jax.numpy as jnp
from jax.experimental import pallas as pl
from jax.experimental.pallas import tpu as pltpu


# ----------------------------- Pallas kernel ------------------------------ #
def _deconv_kernel(x_ref, w_ref, b_ref, o_ref, *, cin, compute_dtype):
    # x_ref: (1, Cin, T)   input activations (original dtype)
    # w_ref: (Cout4, Cin)  weights (already in compute_dtype)
    # b_ref: (Cout4, 1)    bias (f32)
    # o_ref: (1, Cout4, T) output tile
    x = x_ref[0]          # (Cin, T)
    w = w_ref[...]        # (Cout4, Cin)
    if cin <= 8:
        # Tiny-K regime: a (Cout4, cin) x (cin, T) dot would use <1% of the MXU;
        # unrolled VPU broadcast-FMA with f32 accumulation instead.
        xf = x.astype(jnp.float32)
        wf = w.astype(jnp.float32)
        acc = wf[:, 0:1] * xf[0:1, :]
        for ci in range(1, cin):
            acc = acc + wf[:, ci:ci + 1] * xf[ci:ci + 1, :]
    else:
        # MXU path; cast activations in-kernel (saves a wrapper-side HBM pass),
        # accumulate in f32.
        acc = jnp.dot(w, x.astype(compute_dtype),
                      preferred_element_type=jnp.float32)
    o_ref[0] = (acc + b_ref[...]).astype(o_ref.dtype)


def _pick_hw_tile(hw, cin, cout4, in_itemsize, out_itemsize=4,
                  vmem_budget=24 * 1024 * 1024):
    """Largest HW tile that keeps double-buffered in/out tiles under the VMEM
    budget and satisfies the (8,128) lane rule: a multiple of 128 that divides
    HW, or HW itself (full-extent block is always legal)."""
    per_elem = 2 * (cin * in_itemsize + cout4 * out_itemsize)  # double-buffered
    t_max = max(128, vmem_budget // per_elem)
    if hw <= t_max:
        return hw
    t = (t_max // 128) * 128
    while t >= 128:
        if hw % t == 0:
            return t
        t -= 128
    return hw  # fallback: whole row block


def _conv_transpose_2x2(x, w_t, b_col, *, out_dtype, hw_tile, compute_dtype):
    """x: (N, Cin, HW), w_t: (Cout4, Cin), b_col: (Cout4, 1) -> (N, Cout4, HW)."""
    N, Cin, HW = x.shape
    Cout4 = w_t.shape[0]
    grid = (N, HW // hw_tile)
    kernel = functools.partial(_deconv_kernel, cin=Cin, compute_dtype=compute_dtype)

    flops = 2 * N * Cout4 * Cin * HW
    bytes_accessed = (x.size * x.dtype.itemsize
                      + w_t.size * w_t.dtype.itemsize
                      + b_col.size * b_col.dtype.itemsize
                      + N * Cout4 * HW * jnp.dtype(out_dtype).itemsize)

    return pl.pallas_call(
        kernel,
        out_shape=jax.ShapeDtypeStruct((N, Cout4, HW), out_dtype),
        grid_spec=pltpu.PrefetchScalarGridSpec(
            num_scalar_prefetch=0,
            grid=grid,
            in_specs=[
                pl.BlockSpec((1, Cin, hw_tile), lambda n, j: (n, 0, j)),
                # weight / bias: constant block index -> stays resident in VMEM
                pl.BlockSpec((Cout4, Cin), lambda n, j: (0, 0)),
                pl.BlockSpec((Cout4, 1), lambda n, j: (0, 0)),
            ],
            out_specs=pl.BlockSpec((1, Cout4, hw_tile), lambda n, j: (n, 0, j)),
        ),
        compiler_params=pltpu.CompilerParams(
            dimension_semantics=("parallel", "parallel"),
            vmem_limit_bytes=48 * 1024 * 1024,
        ),
        cost_estimate=pl.CostEstimate(
            flops=int(flops), transcendentals=0, bytes_accessed=int(bytes_accessed)),
    )(x, w_t, b_col)


# ------------------------------ Up module --------------------------------- #
def _torch_style_pad(x, pads):
    """Replicates F.pad(x, [l, r, t, b]) on NCHW, supporting negative pads (crop)."""
    l, r, t, b = pads
    x = jnp.pad(
        x,
        ((0, 0), (0, 0), (max(t, 0), max(b, 0)), (max(l, 0), max(r, 0))),
    )
    H, W = x.shape[2], x.shape[3]
    return x[:, :, max(-t, 0):H - max(-b, 0), max(-l, 0):W - max(-r, 0)]


@functools.partial(jax.jit, static_argnames=("compute_dtype",))
def up_forward(t1, t2, weight, bias, compute_dtype=jnp.float32):
    """t1: (N, Cin, H, W), t2: (N, C2, H2, W2), weight: (Cin, Cout, 2, 2), bias: (Cout,)."""
    N, Cin, H, W = t1.shape
    Cout = weight.shape[1]
    Cout4 = Cout * 4
    HW = H * W

    # (N, Cin, H, W) -> (N, Cin, HW): contiguous reshape, no layout transpose.
    x = t1.reshape(N, Cin, HW)
    # weight (Cin, Cout, 2, 2) -> (Cout*4, Cin), row index = co*4 + kh*2 + kw.
    w_t = weight.reshape(Cin, Cout4).T
    if compute_dtype != weight.dtype:
        w_t = w_t.astype(compute_dtype)          # weights are tiny; cast in wrapper
    # bias per output channel, repeated over the 2x2 kernel positions, as a column.
    b_col = jnp.repeat(bias, 4).reshape(Cout4, 1).astype(jnp.float32)

    hw_tile = _pick_hw_tile(HW, Cin, Cout4, jnp.dtype(t1.dtype).itemsize)

    # (N, Cout*4, HW): lane axis = HW (multiple of 128) -> lane-dense stores.
    y_flat = _conv_transpose_2x2(
        x, w_t, b_col, out_dtype=t1.dtype, hw_tile=hw_tile,
        compute_dtype=compute_dtype)

    # Scatter 2x2 blocks: (N, Cout*4, HW) -> (N, Cout, 2H, 2W).
    y = y_flat.reshape(N, Cout, 2, 2, H, W)
    y = jnp.transpose(y, (0, 1, 4, 2, 5, 3)).reshape(N, Cout, 2 * H, 2 * W)

    # Crop t2 exactly as F.pad(t2, [-dx//2, -dx+dx//2, -dy//2, -dy+dy//2]).
    diffY = t2.shape[2] - y.shape[2]
    diffX = t2.shape[3] - y.shape[3]
    t2c = _torch_style_pad(
        t2, [-diffX // 2, -diffX + diffX // 2, -diffY // 2, -diffY + diffY // 2]
    )

    # TODO(synk): fusing the 2x2 pixel-shuffle + concat into the kernel output
    # (lane/sublane-strided stores into a concat-shaped buffer) would save one
    # HBM pass over y; kept as plain-JAX memory-movement glue for lowering
    # robustness (XLA fuses transpose+concat into a single copy pass).
    return jnp.concatenate([t2c, y], axis=1)


# ------------------------------ reference --------------------------------- #
def up_reference(t1, t2, weight, bias):
    # out[n, co, 2h+kh, 2w+kw] = sum_ci t1[n,ci,h,w] * weight[ci,co,kh,kw] + bias[co]
    N, Cin, H, W = t1.shape
    Cout = weight.shape[1]
    y = jnp.einsum("nihw,iokl->nohkwl", t1, weight)
    y = y.reshape(N, Cout, 2 * H, 2 * W) + bias[None, :, None, None]
    diffY = t2.shape[2] - y.shape[2]
    diffX = t2.shape[3] - y.shape[3]
    t2c = _torch_style_pad(
        t2, [-diffX // 2, -diffX + diffX // 2, -diffY // 2, -diffY + diffY // 2]
    )
    return jnp.concatenate([t2c, y], axis=1)


# --------------------------------- main ------------------------------------ #
if __name__ == "__main__":
    key = jax.random.PRNGKey(0)
    k1, k2, kw, kb = jax.random.split(key, 4)

    in_channels, out_channels = 4, 4
    N, H, W = 2, 16, 16        # t1 spatial -> upsampled to 32x32; H*W=256 (lane-dense)
    C2, H2, W2 = 6, 34, 34     # skip connection gets cropped to 32x32

    t1 = jax.random.normal(k1, (N, in_channels, H, W), dtype=jnp.float32)
    t2 = jax.random.normal(k2, (N, C2, H2, W2), dtype=jnp.float32)

    # ConvTranspose2d parameter shapes: weight (Cin, Cout, 2, 2), bias (Cout,)
    weight = 0.1 * jax.random.normal(
        kw, (in_channels, out_channels, 2, 2), dtype=jnp.float32
    )
    bias = 0.1 * jax.random.normal(kb, (out_channels,), dtype=jnp.float32)

    ref = up_reference(t1, t2, weight, bias)

    # f32 compute path
    out = jax.block_until_ready(up_forward(t1, t2, weight, bias))
    assert out.shape == (N, C2 + out_channels, 2 * H, 2 * W), out.shape
    assert jnp.allclose(out, ref, atol=1e-5, rtol=1e-5), "f32 mismatch vs reference"

    # bf16 compute path (v6e/v7x MXU-friendly; f32 accumulation) -> looser tolerance
    out_bf16 = jax.block_until_ready(
        up_forward(t1, t2, weight, bias, compute_dtype=jnp.bfloat16)
    )
    assert out_bf16.shape == out.shape
    assert jnp.allclose(out_bf16, ref, atol=3e-2, rtol=3e-2), "bf16 mismatch vs reference"

    print("KERNEL_OK")
</pallas_src>

<mosaic_0001>
module attributes {stable_mosaic.version = 11 : i64} {
  func.func @_deconv_kernel(%arg0: i32, %arg1: i32, %arg2: memref<1x4x256xf32, #tpu.memory_space<vmem>>, %arg3: memref<16x4xf32, #tpu.memory_space<vmem>>, %arg4: memref<16x1xf32, #tpu.memory_space<vmem>>, %arg5: memref<1x16x256xf32, #tpu.memory_space<vmem>>) attributes {dimension_semantics = [#tpu.dimension_semantics<parallel>, #tpu.dimension_semantics<parallel>], iteration_bounds = array<i64: 2, 1>, scalar_prefetch = 0 : i64, scratch_operands = 0 : i64, tpu.core_type = #tpu.core_type<tc>, window_params = [{transform_indices = @transform_0, window_bounds = array<i64: 1, 4, 256>}, {pipeline_mode = #tpu.pipeline_mode<synchronous>, transform_indices = @transform_1, window_bounds = array<i64: 16, 4>}, {pipeline_mode = #tpu.pipeline_mode<synchronous>, transform_indices = @transform_2, window_bounds = array<i64: 16, 1>}, {transform_indices = @transform_3, window_bounds = array<i64: 1, 16, 256>}]} {
    %c0 = arith.constant 0 : index
    %c0_0 = arith.constant 0 : index
    %c0_1 = arith.constant 0 : index
    %0 = vector.load %arg2[%c0, %c0_0, %c0_1] : memref<1x4x256xf32, #tpu.memory_space<vmem>>, vector<1x4x256xf32>
    %1 = vector.shape_cast %0 : vector<1x4x256xf32> to vector<4x256xf32>
    %c0_2 = arith.constant 0 : index
    %c0_3 = arith.constant 0 : index
    %2 = vector.load %arg3[%c0_2, %c0_3] : memref<16x4xf32, #tpu.memory_space<vmem>>, vector<16x4xf32>
    %3 = vector.extract_strided_slice %2 {offsets = [0, 0], sizes = [16, 1], strides = [1, 1]} : vector<16x4xf32> to vector<16x1xf32>
    %4 = vector.extract_strided_slice %1 {offsets = [0, 0], sizes = [1, 256], strides = [1, 1]} : vector<4x256xf32> to vector<1x256xf32>
    %5 = vector.broadcast %3 : vector<16x1xf32> to vector<16x256xf32>
    %6 = vector.broadcast %4 : vector<1x256xf32> to vector<16x256xf32>
    %7 = arith.mulf %5, %6 : vector<16x256xf32>
    %8 = vector.extract_strided_slice %2 {offsets = [0, 1], sizes = [16, 1], strides = [1, 1]} : vector<16x4xf32> to vector<16x1xf32>
    %9 = vector.extract_strided_slice %1 {offsets = [1, 0], sizes = [1, 256], strides = [1, 1]} : vector<4x256xf32> to vector<1x256xf32>
    %10 = vector.broadcast %8 : vector<16x1xf32> to vector<16x256xf32>
    %11 = vector.broadcast %9 : vector<1x256xf32> to vector<16x256xf32>
    %12 = arith.mulf %10, %11 : vector<16x256xf32>
    %13 = arith.addf %7, %12 : vector<16x256xf32>
    %14 = vector.extract_strided_slice %2 {offsets = [0, 2], sizes = [16, 1], strides = [1, 1]} : vector<16x4xf32> to vector<16x1xf32>
    %15 = vector.extract_strided_slice %1 {offsets = [2, 0], sizes = [1, 256], strides = [1, 1]} : vector<4x256xf32> to vector<1x256xf32>
    %16 = vector.broadcast %14 : vector<16x1xf32> to vector<16x256xf32>
    %17 = vector.broadcast %15 : vector<1x256xf32> to vector<16x256xf32>
    %18 = arith.mulf %16, %17 : vector<16x256xf32>
    %19 = arith.addf %13, %18 : vector<16x256xf32>
    %20 = vector.extract_strided_slice %2 {offsets = [0, 3], sizes = [16, 1], strides = [1, 1]} : vector<16x4xf32> to vector<16x1xf32>
    %21 = vector.extract_strided_slice %1 {offsets = [3, 0], sizes = [1, 256], strides = [1, 1]} : vector<4x256xf32> to vector<1x256xf32>
    %22 = vector.broadcast %20 : vector<16x1xf32> to vector<16x256xf32>
    %23 = vector.broadcast %21 : vector<1x256xf32> to vector<16x256xf32>
    %24 = arith.mulf %22, %23 : vector<16x256xf32>
    %25 = arith.addf %19, %24 : vector<16x256xf32>
    %c0_4 = arith.constant 0 : index
    %c0_5 = arith.constant 0 : index
    %26 = vector.load %arg4[%c0_4, %c0_5] : memref<16x1xf32, #tpu.memory_space<vmem>>, vector<16x1xf32>
    %27 = vector.broadcast %26 : vector<16x1xf32> to vector<16x256xf32>
    %28 = arith.addf %25, %27 : vector<16x256xf32>
    %c0_6 = arith.constant 0 : index
    %c0_7 = arith.constant 0 : index
    %c0_8 = arith.constant 0 : index
    %29 = vector.load %arg5[%c0_6, %c0_7, %c0_8] : memref<1x16x256xf32, #tpu.memory_space<vmem>>, vector<1x16x256xf32>
    %30 = vector.shape_cast %29 : vector<1x16x256xf32> to vector<16x256xf32>
    %31 = vector.shape_cast %28 : vector<16x256xf32> to vector<1x16x256xf32>
    tpu.vector_store %arg5[%c0_6, %c0_7, %c0_8], %31 {strides = array<i32>} : memref<1x16x256xf32, #tpu.memory_space<vmem>>, vector<1x16x256xf32>,
    return
  }
  func.func @transform_0(%arg0: i32, %arg1: i32) -> (i32, i32, i32) {
    %c0_i32 = arith.constant 0 : i32
    %c0_i32_0 = arith.constant 0 : i32
    return %arg0, %c0_i32, %arg1 : i32, i32, i32
  }
  func.func @transform_1(%arg0: i32, %arg1: i32) -> (i32, i32) {
    %c0_i32 = arith.constant 0 : i32
    %c0_i32_0 = arith.constant 0 : i32
    %c0_i32_1 = arith.constant 0 : i32
    return %c0_i32, %c0_i32_0 : i32, i32
  }
  func.func @transform_2(%arg0: i32, %arg1: i32) -> (i32, i32) {
    %c0_i32 = arith.constant 0 : i32
    %c0_i32_0 = arith.constant 0 : i32
    %c0_i32_1 = arith.constant 0 : i32
    return %c0_i32, %c0_i32_0 : i32, i32
  }
  func.func @transform_3(%arg0: i32, %arg1: i32) -> (i32, i32, i32) {
    %c0_i32 = arith.constant 0 : i32
    %c0_i32_0 = arith.constant 0 : i32
    return %arg0, %c0_i32, %arg1 : i32, i32, i32
  }
}

</mosaic_0001>

<llo_original>
// kernel: up_forward.1
$region0: #{up_forward.1}
  #allocation0 [shape = 'u32[]', space=smem, size = 0x4, offset = 0x4, fixed_abs, tag = 'smem constant byte address 0x4 - core index']
  #allocation1 [shape = 'u32[72,128]{1,0:T(1,128)}', space=vmem, size = 0x9000, scoped, tag = 'internal scratch']
  %s0 = inlined_call_operand.vmem [shape: f32[2,4,256], index: 0, kind: input, shape index: {}]
  %s1 = inlined_call_operand.vmem [shape: f32[16,4], index: 1, kind: input, shape index: {}]
  %s2 = inlined_call_operand.vmem [shape: f32[16,1], index: 2, kind: input, shape index: {}]
  %s3 = inlined_call_operand.vmem [shape: f32[2,16,256], index: 3, kind: output, shape index: {}]
  %s4 = sld [smem:[#allocation0]]
  $region45: #{up_forward.1} parent=0
    _
  %s6 = ssub.s32 1, %s4
  %s7 = scalar_select 0, %s6, %s4
  loop: start=0, step=1, limit=4
  $region2: #{up_forward.1} parent=0 // loop_pre_header
    _
  $region3: #{up_forward.1} parent=0 // loop_header
    %s9 = sphi 0, %s13
    %p10 = scmp.ge.s32.totalorder %s9, 4
    %s16 = sphi 0, %s28
    %s17 = sphi 0, %s24
    %s18 = sphi 0, %s16
    %s19 = sphi 0, %s17
    %s20 = sphi 0, %s18
    %s21 = sphi 0, %s19
    %s33 = sphi 0, %s35
    %s36 = sphi 0, %s33
    %s37 = sphi 0, %s36
    %s53 = sphi 0, %s37
    %s57 = sphi 0, %s57
    %s59 = sphi 0, %s57
    %s60 = sphi 0, %s59
    %s74 = sphi 0, %s60
    %s78 = sphi 0, %s78
    %s80 = sphi 0, %s78
    %s81 = sphi 0, %s80
    %s95 = sphi 0, %s81
    %s103 = sphi 0, %s105
    %s106 = sphi 0, %s103
    %s107 = sphi 0, %s106
    %s123 = sphi 0, %s107
  $region4: #{up_forward.1} parent=0 // loop_header_branch
    %12 = sbr.rel (%p10) target = $region8
  $region5: #{up_forward.1} parent=0 // loop_body
    %s14 = ssub.s32 %s9, 1
    %s15 = ssub.s32 %s9, 2
    %s22 = sadd.s32 1, %s17
    %p23 = scmp.ge.s32.totalorder %s22, 1
    %s24 = scalar_select %p23, 0, %s22
    %s25 = sadd.s32 1, %s16
    %s26 = scalar_select %p23, %s25, %s16
    %p27 = scmp.ge.s32.totalorder %s26, 2
    %s28 = scalar_select %p27, 0, %s26
    %s29 = ssub.s32 %s16, %s28
    %s30 = ssub.s32 %s17, %s24
    %s31 = sor.u32 %s29, %s30
    %p32 = scmp.eq.s32.totalorder %s31, 0
    %s34 = sadd.s32 %s33, 1
    %s35 = scalar_select %p32, %s33, %s34
    %p38 = pneg %p32
    %p39 = scmp.eq.s32.totalorder %s9, 1
    %p40 = por %p38, %p39
    %p41 = scmp.ne.s32.totalorder %s33, %s36
    %p42 = scmp.eq.s32.totalorder %s9, 0
    %p43 = por %p41, %p42
    %p44 = scmp.ne.s32.totalorder %s33, %s36
    %p45 = scmp.eq.s32.totalorder %s14, 1
    %p46 = por %p44, %p45
    %p47 = scmp.ne.s32.totalorder %s36, %s37
    %p48 = scmp.eq.s32.totalorder %s14, 0
    %p49 = por %p47, %p48
    %p50 = scmp.ne.s32.totalorder %s36, %s37
    %p51 = scmp.eq.s32.totalorder %s15, 1
    %p52 = por %p50, %p51
    %p54 = scmp.ne.s32.totalorder %s37, %s53
    %p55 = scmp.eq.s32.totalorder %s15, 0
    %p56 = por %p54, %p55
    %s58 = sadd.s32 %s57, 1
    %p61 = scmp.eq.s32.totalorder %s9, 1
    %p62 = scmp.ne.s32.totalorder %s57, %s59
    %p63 = scmp.eq.s32.totalorder %s9, 0
    %p64 = por %p62, %p63
    %p65 = scmp.ne.s32.totalorder %s57, %s59
    %p66 = scmp.eq.s32.totalorder %s14, 1
    %p67 = por %p65, %p66
    %p68 = scmp.ne.s32.totalorder %s59, %s60
    %p69 = scmp.eq.s32.totalorder %s14, 0
    %p70 = por %p68, %p69
    %p71 = scmp.ne.s32.totalorder %s59, %s60
    %p72 = scmp.eq.s32.totalorder %s15, 1
    %p73 = por %p71, %p72
    %p75 = scmp.ne.s32.totalorder %s60, %s74
    %p76 = scmp.eq.s32.totalorder %s15, 0
    %p77 = por %p75, %p76
    %s79 = sadd.s32 %s78, 1
    %p82 = scmp.eq.s32.totalorder %s9, 1
    %p83 = scmp.ne.s32.totalorder %s78, %s80
    %p84 = scmp.eq.s32.totalorder %s9, 0
    %p85 = por %p83, %p84
    %p86 = scmp.ne.s32.totalorder %s78, %s80
    %p87 = scmp.eq.s32.totalorder %s14, 1
    %p88 = por %p86, %p87
    %p89 = scmp.ne.s32.totalorder %s80, %s81
    %p90 = scmp.eq.s32.totalorder %s14, 0
    %p91 = por %p89, %p90
    %p92 = scmp.ne.s32.totalorder %s80, %s81
    %p93 = scmp.eq.s32.totalorder %s15, 1
    %p94 = por %p92, %p93
    %p96 = scmp.ne.s32.totalorder %s81, %s95
    %p97 = scmp.eq.s32.totalorder %s15, 0
    %p98 = por %p96, %p97
    %s99 = ssub.s32 %s16, %s28
    %s100 = ssub.s32 %s17, %s24
    %s101 = sor.u32 %s99, %s100
    %p102 = scmp.eq.s32.totalorder %s101, 0
    %s104 = sadd.s32 %s103, 1
    %s105 = scalar_select %p102, %s103, %s104
    %p108 = pneg %p102
    %p109 = scmp.eq.s32.totalorder %s9, 1
    %p110 = por %p108, %p109
    %p111 = scmp.ne.s32.totalorder %s103, %s106
    %p112 = scmp.eq.s32.totalorder %s9, 0
    %p113 = por %p111, %p112
    %p114 = scmp.ne.s32.totalorder %s103, %s106
    %p115 = scmp.eq.s32.totalorder %s14, 1
    %p116 = por %p114, %p115
    %p117 = scmp.ne.s32.totalorder %s106, %s107
    %p118 = scmp.eq.s32.totalorder %s14, 0
    %p119 = por %p117, %p118
    %p120 = scmp.ne.s32.totalorder %s106, %s107
    %p121 = scmp.eq.s32.totalorder %s15, 1
    %p122 = por %p120, %p121
    %p124 = scmp.ne.s32.totalorder %s107, %s123
    %p125 = scmp.eq.s32.totalorder %s15, 0
    %p126 = por %p124, %p125
    %p127 = scmp.le.s32.totalorder 1, %s9
    %p128 = scmp.lt.s32.totalorder %s9, 3
    %p129 = pnand %p127, %p128
    %p130 = pneg %p129
    // Predicated region
    $region9: #{up_forward.1} parent=5 // pred_check
      _
    $region10: #{up_forward.1} parent=5 // pred_check_branch
      %132 = sbr.rel (%p129) target = $region12
    $region11: #{up_forward.1} parent=5 // pred_region
      %s133 = ssub.s32 %s9, 1
      // Predicated region
      $region13: #{up_forward.1} parent=11 // pred_check
        %p134 = pneg %p70
      $region14: #{up_forward.1} parent=11 // pred_check_branch
        %136 = sbr.rel (%p134) target = $region16
      $region15: #{up_forward.1} parent=11 // pred_region
        _
      $region16: #{up_forward.1} parent=11 // pred_fallthru
        _
      // Predicated region
      $region17: #{up_forward.1} parent=11 // pred_check
        %p137 = pneg %p91
      $region18: #{up_forward.1} parent=11 // pred_check_branch
        %139 = sbr.rel (%p137) target = $region20
      $region19: #{up_forward.1} parent=11 // pred_region
        _
      $region20: #{up_forward.1} parent=11 // pred_fallthru
        _
    $region12: #{up_forward.1} parent=5 // pred_fallthru
      _
    %p140 = scmp.lt.s32.totalorder %s9, 2
    // Predicated region
    $region21: #{up_forward.1} parent=5 // pred_check
      %p141 = pneg %p140
    $region22: #{up_forward.1} parent=5 // pred_check_branch
      %143 = sbr.rel (%p141) target = $region24
    $region23: #{up_forward.1} parent=5 // pred_region
      // Predicated region
      $region25: #{up_forward.1} parent=23 // pred_check
        %p144 = pneg %p43
      $region26: #{up_forward.1} parent=23 // pred_check_branch
        %146 = sbr.rel (%p144) target = $region28
      $region27: #{up_forward.1} parent=23 // pred_region
        %s147 = smul.u32 2, %s17
        %p148 = scmp.lt.s32.totalorder %s16, 1
        %s149 = scalar_select %p148, %s16, 1
        %p150 = scmp.lt.s32.totalorder %s147, 1
        %s151 = scalar_select %p150, %s147, 1
        %s152 = smul.addr %s149, 2
        %s153 = sadd.s32 %s151, %s152
        %s154 = smul.addr %s153, 4
        %s155 = scalar_lea.vmem %s0, %s154
        %s156 = smul.u32 2, %s17
      $region28: #{up_forward.1} parent=23 // pred_fallthru
        _
    $region24: #{up_forward.1} parent=5 // pred_fallthru
      _
    %p157 = scmp.le.s32.totalorder 1, %s9
    %p158 = scmp.lt.s32.totalorder %s9, 3
    %p159 = pnand %p157, %p158
    %p160 = pneg %p159
    // Predicated region
    $region29: #{up_forward.1} parent=5 // pred_check
      _
    $region30: #{up_forward.1} parent=5 // pred_check_branch
      %162 = sbr.rel (%p159) target = $region32
    $region31: #{up_forward.1} parent=5 // pred_region
      %s163 = ssub.s32 %s9, 1
      %s164 = smul.u32 2, %s19
      %p165 = scmp.lt.s32.totalorder %s18, 1
      %s166 = scalar_select %p165, %s18, 1
      %p167 = scmp.lt.s32.totalorder %s164, 1
      %s168 = scalar_select %p167, %s164, 1
      %s169 = smul.addr %s166, 2
      %s170 = sadd.s32 %s168, %s169
      %s171 = smul.addr %s170, 4
      %s172 = scalar_lea.vmem %s0, %s171
      %p173 = pneg %p49
      %p174 = pneg %p46
      %p175 = pneg %p70
      %p176 = pneg %p67
      %p177 = pneg %p91
      %p178 = pneg %p88
      %p179 = pneg %p119
      %p180 = pneg %p116
      %s181 = smul.u32 2, %s19
      %p182 = scmp.lt.s32.totalorder %s18, 1
      %s183 = scalar_select %p182, %s18, 1
      %p184 = scmp.lt.s32.totalorder %s181, 1
      %s185 = scalar_select %p184, %s181, 1
      %s186 = smul.addr %s183, 4
      %s187 = sadd.s32 %s185, %s186
      %s188 = smul.addr %s187, 8
      %s189 = scalar_lea.vmem %s3, %s188
      %s190 = smul.u32 2, %s19
      %p191 = scmp.lt.s32.totalorder %s18, 1
      %s192 = scalar_select %p191, %s18, 1
      %p193 = scmp.lt.s32.totalorder %s190, 1
      %s194 = scalar_select %p193, %s190, 1
      %s195 = smul.addr %s192, 2
      %s196 = sadd.s32 %s194, %s195
      %s197 = smul.addr %s196, 4
      %s198 = scalar_lea.vmem %s0, %s197
      %s199 = smul.u32 2, %s19
      %s200 = smul.u32 2, %s19
      %p201 = scmp.lt.s32.totalorder %s18, 1
      %s202 = scalar_select %p201, %s18, 1
      %p203 = scmp.lt.s32.totalorder %s200, 1
      %s204 = scalar_select %p203, %s200, 1
      %s205 = smul.addr %s202, 4
      %s206 = sadd.s32 %s204, %s205
      %s207 = smul.addr %s206, 8
      %s208 = scalar_lea.vmem %s3, %s207
      %s209 = smul.u32 2, %s19
      %v210 = vld [vmem:[%s198] sm:$0xff]
      %v211 = vld [vmem:[%s1] sm:$0xff]
      %v212 = vld [vmem:[%s1 + $0x8] sm:$0xff]
      %214 = vset.pattern.permute.xlu0 0
      %215 = vperm.xlu0 %214, %v211
      %v216 = vpop.permute.xlu0 %215
      %219 = vset.pattern.permute.xlu0 0
      %220 = vperm.xlu0 %219, %v212
      %v221 = vpop.permute.xlu0 %220
      %v224 = vperm.slane %v210, 0
      %v225 = vperm.slane %v210, 4
      %v228 = vperm.slane %v224, 0
      %v229 = vperm.slane %v225, 0
      %v230 = vmul.f32 %v216, %v228
      %v231 = vmul.f32 %v216, %v229
      %v232 = vmul.f32 %v221, %v228
      %v233 = vmul.f32 %v221, %v229
      %234 = vset.pattern.permute.xlu0 1
      %235 = vperm.xlu0 %234, %v211
      %v236 = vpop.permute.xlu0 %235
      %238 = vset.pattern.permute.xlu0 1
      %239 = vperm.xlu0 %238, %v212
      %v240 = vpop.permute.xlu0 %239
      %v242 = vperm.slane %v210, 1
      %v243 = vperm.slane %v210, 5
      %v246 = vperm.slane %v242, 1
      %v247 = vperm.slane %v243, 1
      %v248 = vmul.f32 %v236, %v246
      %v249 = vmul.f32 %v236, %v247
      %v250 = vmul.f32 %v240, %v246
      %v251 = vmul.f32 %v240, %v247
      %v252 = vadd.f32 %v230, %v248
      %v253 = vadd.f32 %v231, %v249
      %v254 = vadd.f32 %v232, %v250
      %v255 = vadd.f32 %v233, %v251
      %256 = vset.pattern.permute.xlu0 2
      %257 = vperm.xlu0 %256, %v211
      %v258 = vpop.permute.xlu0 %257
      %260 = vset.pattern.permute.xlu0 2
      %261 = vperm.xlu0 %260, %v212
      %v262 = vpop.permute.xlu0 %261
      %v264 = vperm.slane %v210, 2
      %v265 = vperm.slane %v210, 6
      %v268 = vperm.slane %v264, 2
      %v269 = vperm.slane %v265, 2
      %v270 = vmul.f32 %v258, %v268
      %v271 = vmul.f32 %v258, %v269
      %v272 = vmul.f32 %v262, %v268
      %v273 = vmul.f32 %v262, %v269
      %v274 = vadd.f32 %v252, %v270
      %v275 = vadd.f32 %v253, %v271
      %v276 = vadd.f32 %v254, %v272
      %v277 = vadd.f32 %v255, %v273
      %278 = vset.pattern.permute.xlu0 3
      %279 = vperm.xlu0 %278, %v211
      %v280 = vpop.permute.xlu0 %279
      %282 = vset.pattern.permute.xlu0 3
      %283 = vperm.xlu0 %282, %v212
      %v284 = vpop.permute.xlu0 %283
      %v286 = vperm.slane %v210, 3
      %v287 = vperm.slane %v210, 7
      %v290 = vperm.slane %v286, 3
      %v291 = vperm.slane %v287, 3
      %v292 = vmul.f32 %v280, %v290
      %v293 = vmul.f32 %v280, %v291
      %v294 = vmul.f32 %v284, %v290
      %v295 = vmul.f32 %v284, %v291
      %v296 = vadd.f32 %v274, %v292
      %v297 = vadd.f32 %v275, %v293
      %v298 = vadd.f32 %v276, %v294
      %v299 = vadd.f32 %v277, %v295
      %v300 = vld [vmem:[%s2] sm:$0xff]
      %v301 = vld [vmem:[%s2 + $0x8] sm:$0xff]
      %303 = vset.pattern.permute.xlu0 0
      %304 = vperm.xlu0 %303, %v300
      %v305 = vpop.permute.xlu0 %304
      %308 = vset.pattern.permute.xlu0 0
      %309 = vperm.xlu0 %308, %v301
      %v310 = vpop.permute.xlu0 %309
      %v312 = vadd.f32 %v296, %v305
      %v313 = vadd.f32 %v297, %v305
      %v314 = vadd.f32 %v298, %v310
      %v315 = vadd.f32 %v299, %v310
      %316 = vst [vmem:[%s208] sm:$0xff] %v312
      %317 = vst [vmem:[%s208 + $0x8] sm:$0xff] %v313
      %318 = vst [vmem:[%s208 + $0x10] sm:$0xff] %v314
      %319 = vst [vmem:[%s208 + $0x18] sm:$0xff] %v315
      %s320 = smul.u32 2, %s19
      %p321 = scmp.lt.s32.totalorder %s18, 1
      %s322 = scalar_select %p321, %s18, 1
      %p323 = scmp.lt.s32.totalorder %s320, 1
      %s324 = scalar_select %p323, %s320, 1
      %s325 = smul.addr %s322, 4
      %s326 = sadd.s32 %s324, %s325
      %s327 = smul.addr %s326, 8
      %s328 = scalar_lea.vmem %s3, %s327
      // Predicated region
      $region33: #{up_forward.1} parent=31 // pred_check
        %p329 = pneg %p116
      $region34: #{up_forward.1} parent=31 // pred_check_branch
        %331 = sbr.rel (%p329) target = $region36
      $region35: #{up_forward.1} parent=31 // pred_region
        %s332 = smul.u32 2, %s19
      $region36: #{up_forward.1} parent=31 // pred_fallthru
        _
    $region32: #{up_forward.1} parent=5 // pred_fallthru
      _
    %p333 = scmp.le.s32.totalorder 2, %s9
    // Predicated region
    $region37: #{up_forward.1} parent=5 // pred_check
      %p334 = pneg %p333
    $region38: #{up_forward.1} parent=5 // pred_check_branch
      %336 = sbr.rel (%p334) target = $region40
    $region39: #{up_forward.1} parent=5 // pred_region
      %s337 = ssub.s32 %s9, 2
      // Predicated region
      $region41: #{up_forward.1} parent=39 // pred_check
        %p338 = pneg %p122
      $region42: #{up_forward.1} parent=39 // pred_check_branch
        %340 = sbr.rel (%p338) target = $region44
      $region43: #{up_forward.1} parent=39 // pred_region
        %s341 = smul.u32 2, %s21
        %p342 = scmp.lt.s32.totalorder %s20, 1
        %s343 = scalar_select %p342, %s20, 1
        %p344 = scmp.lt.s32.totalorder %s341, 1
        %s345 = scalar_select %p344, %s341, 1
        %s346 = smul.addr %s343, 4
        %s347 = sadd.s32 %s345, %s346
        %s348 = smul.addr %s347, 8
        %s349 = scalar_lea.vmem %s3, %s348
      $region44: #{up_forward.1} parent=39 // pred_fallthru
        _
    $region40: #{up_forward.1} parent=5 // pred_fallthru
      _
  $region6: #{up_forward.1} parent=0 // loop_footer
    %s13 = sadd.s32 1, %s9
  $region7: #{up_forward.1} parent=0 // loop_footer_branch
    %8 = sbr.rel target = $region3
  $region8: #{up_forward.1} parent=0 // loop_exit
    _

</llo_original>
